<compile_context>
chip_gen: v5e
topology: v5e:2x2
jax: 0.10.0
libtpu: 0.0.40
codegen_flags: <defaults>
</compile_context>

<pallas_src>
import jax
import jax.numpy as jnp
from jax import lax
from jax.experimental import pallas as pl
from jax.experimental.pallas import tpu as pltpu

BN_EPS = 1e-05


def _round_up(x, m):
    return ((x + m - 1) // m) * m


# ---------------------------------------------------------------------------
# Pallas kernel.  Grid = (batch, L2 tiles).  The L2 axis is a reduction
# ("arbitrary"): scat-sum / counts accumulate in VMEM scratch.
# ---------------------------------------------------------------------------
def line_layer_kernel(idx_ref, ldesc_ref, line_enc_ref,
                      w1a_ref, w1b_ref, w1c_ref, b1_ref, w2_ref, b2_ref,
                      out_ref, acc_ref, cnt_ref):
    k = pl.program_id(1)

    @pl.when(k == 0)
    def _init():
        acc_ref[...] = jnp.zeros_like(acc_ref)
        cnt_ref[...] = jnp.zeros_like(cnt_ref)

    ldesc = ldesc_ref[0]          # (D, Np)   junction descriptors (NCW)
    line_enc = line_enc_ref[0]    # (D, TL2)  endpoint encodings for this tile
    idx = idx_ref[0]              # (TL2, 1)  int32 junction index per endpoint

    tl2 = idx.shape[0]
    n_pad = ldesc.shape[1]

    # One-hot^T (TL2, Np): oh_t[l, n] = 1 iff idx[l] == n  (idx = -1 => all-zero row)
    n_iota = lax.broadcasted_iota(jnp.int32, (tl2, n_pad), 1)
    oh_t = (n_iota == idx).astype(jnp.float32)

    # Gather on the MXU: line_desc[:, l] = ldesc[:, idx[l]]          -> (D, TL2)
    line_desc = lax.dot_general(ldesc, oh_t, (((1,), (1,)), ((), ())),
                                preferred_element_type=jnp.float32)

    # Endpoint-pair flip: swap adjacent columns (2i <-> 2i+1) with lane rolls
    # (XLU) + a parity select (VPU) instead of a second one-hot matmul.
    right = pltpu.roll(line_desc, 1, axis=1)        # col l-1
    left = pltpu.roll(line_desc, tl2 - 1, axis=1)   # col l+1
    lane_par = lax.broadcasted_iota(jnp.int32, (1, tl2), 1) & 1
    line_desc_flip = jnp.where(lane_par == 0, left, right)

    # MLP (Conv1d(3D->2D) + folded BN + ReLU + Conv1d(2D->D)); concat avoided
    # by splitting w1 into three (2D, D) blocks.
    h = (jnp.dot(w1a_ref[...], line_desc, preferred_element_type=jnp.float32)
         + jnp.dot(w1b_ref[...], line_desc_flip, preferred_element_type=jnp.float32)
         + jnp.dot(w1c_ref[...], line_enc, preferred_element_type=jnp.float32)
         + b1_ref[...])
    h = jnp.maximum(h, 0.0)
    lupdate = (jnp.dot(w2_ref[...], h, preferred_element_type=jnp.float32)
               + b2_ref[...])                                            # (D, TL2)

    # Scatter-sum and endpoint counts into resident accumulators.
    acc_ref[...] += lax.dot_general(lupdate, oh_t, (((1,), (0,)), ((), ())),
                                    preferred_element_type=jnp.float32)  # (D, Np)
    cnt_ref[...] += jnp.sum(oh_t, axis=0, keepdims=True)                 # (1, Np)

    @pl.when(k == pl.num_programs(1) - 1)
    def _finalize():
        cnt = cnt_ref[...]
        # scatter_reduce(reduce='mean', include_self=False): 0 where no endpoint.
        inv = jnp.where(cnt > 0.0, 1.0 / jnp.maximum(cnt, 1.0), 0.0)
        out_ref[0] = (ldesc + acc_ref[...] * inv).astype(out_ref.dtype)


# ---------------------------------------------------------------------------
# Wrapper: padding + pallas_call.  Everything stays NCW.
# ---------------------------------------------------------------------------
def line_layer_branch(ldesc, line_enc, lines_junc_idx, folded_params, *, tl2=128):
    b_size, dim, n_junc = ldesc.shape
    n_end = lines_junc_idx.shape[1]
    assert n_end % 2 == 0

    w1a, w1b, w1c, b1, w2, b2 = folded_params

    n_pad = _round_up(max(n_junc, 1), 128)
    l2_pad = _round_up(max(n_end, 1), tl2)

    ldesc_p = jnp.pad(ldesc, ((0, 0), (0, 0), (0, n_pad - n_junc)))
    line_enc_p = jnp.pad(line_enc, ((0, 0), (0, 0), (0, l2_pad - n_end)))
    idx_p = jnp.pad(lines_junc_idx.astype(jnp.int32),
                    ((0, 0), (0, l2_pad - n_end)), constant_values=-1)
    idx_p = idx_p[:, :, None]                     # (B, L2p, 1) column layout

    grid = (b_size, l2_pad // tl2)

    out = pl.pallas_call(
        line_layer_kernel,
        out_shape=jax.ShapeDtypeStruct((b_size, dim, n_pad), ldesc.dtype),
        grid_spec=pltpu.PrefetchScalarGridSpec(
            num_scalar_prefetch=0,
            grid=grid,
            in_specs=[
                pl.BlockSpec((1, tl2, 1), lambda bi, k: (bi, k, 0)),      # idx
                pl.BlockSpec((1, dim, n_pad), lambda bi, k: (bi, 0, 0)),  # ldesc
                pl.BlockSpec((1, dim, tl2), lambda bi, k: (bi, 0, k)),    # line_enc
                pl.BlockSpec((2 * dim, dim), lambda bi, k: (0, 0)),       # w1a
                pl.BlockSpec((2 * dim, dim), lambda bi, k: (0, 0)),       # w1b
                pl.BlockSpec((2 * dim, dim), lambda bi, k: (0, 0)),       # w1c
                pl.BlockSpec((2 * dim, 1), lambda bi, k: (0, 0)),         # b1
                pl.BlockSpec((dim, 2 * dim), lambda bi, k: (0, 0)),       # w2
                pl.BlockSpec((dim, 1), lambda bi, k: (0, 0)),             # b2
            ],
            out_specs=pl.BlockSpec((1, dim, n_pad), lambda bi, k: (bi, 0, 0)),
            scratch_shapes=[
                pltpu.VMEM((dim, n_pad), jnp.float32),   # scatter-sum acc
                pltpu.VMEM((1, n_pad), jnp.float32),     # endpoint counts
            ],
        ),
        compiler_params=pltpu.CompilerParams(
            dimension_semantics=("parallel", "arbitrary"),
            vmem_limit_bytes=32 * 1024 * 1024),
    )(idx_p, ldesc_p, line_enc_p, w1a, w1b, w1c, b1, w2, b2)

    return out[:, :, :n_junc]


def fold_params(w1, b1, bn_gamma, bn_beta, bn_mean, bn_var, w2, b2, dim):
    """Fold eval-mode BatchNorm into conv1 and split w1 for the concat-free MLP."""
    scale = bn_gamma / jnp.sqrt(bn_var + BN_EPS)              # (2D,)
    shift = bn_beta - bn_mean * scale
    w1f = w1 * scale[:, None]                                 # (2D, 3D)
    b1f = b1 * scale + shift
    w1a = w1f[:, :dim]
    w1b = w1f[:, dim:2 * dim]
    w1c = w1f[:, 2 * dim:]
    return (w1a, w1b, w1c, b1f[:, None], w2, b2[:, None])


def line_layer_forward(ldesc0, ldesc1, line_enc0, line_enc1,
                       lines_junc_idx0, lines_junc_idx1, folded_params):
    out0 = line_layer_branch(ldesc0, line_enc0, lines_junc_idx0, folded_params)
    out1 = line_layer_branch(ldesc1, line_enc1, lines_junc_idx1, folded_params)
    return out0, out1


# ---------------------------------------------------------------------------
# Pure-JAX reference (mirrors the PyTorch forward, eval-mode BN, NCW layout).
# ---------------------------------------------------------------------------
def ref_branch(ldesc, line_enc, idx, torch_params):
    w1, b1, gamma, beta, mean, var, w2, b2 = torch_params
    b_size, dim, n_junc = ldesc.shape
    n_end = idx.shape[1]

    gidx = jnp.broadcast_to(idx[:, None, :], (b_size, dim, n_end))
    line_desc = jnp.take_along_axis(ldesc, gidx, axis=2)                 # (B, D, L2)
    flipped = line_desc.reshape(b_size, dim, n_end // 2, 2)[..., ::-1]
    flipped = flipped.reshape(b_size, dim, n_end)
    message = jnp.concatenate([line_desc, flipped, line_enc], axis=1)    # (B, 3D, L2)

    h = jnp.einsum('oc,bcl->bol', w1, message) + b1[None, :, None]
    h = ((h - mean[None, :, None]) / jnp.sqrt(var[None, :, None] + BN_EPS)
         * gamma[None, :, None] + beta[None, :, None])
    h = jnp.maximum(h, 0.0)
    lupdate = jnp.einsum('oc,bcl->bol', w2, h) + b2[None, :, None]       # (B, D, L2)

    lupdate_nld = jnp.transpose(lupdate, (0, 2, 1))                      # (B, L2, D)
    bix = jnp.arange(b_size)[:, None]
    sums = jnp.zeros((b_size, n_junc, dim)).at[bix, idx].add(lupdate_nld)
    counts = jnp.zeros((b_size, n_junc)).at[bix, idx].add(1.0)
    mean_upd = jnp.where(counts[..., None] > 0,
                         sums / jnp.maximum(counts[..., None], 1.0), 0.0)
    return ldesc + jnp.transpose(mean_upd, (0, 2, 1))


# ---------------------------------------------------------------------------
if __name__ == "__main__":
    B, D, N = 2, 32, 16          # batch, feature_dim, num junctions
    NUM_LINES = 4
    L2 = 2 * NUM_LINES           # number of line endpoints

    key = jax.random.PRNGKey(0)
    keys = jax.random.split(key, 12)

    # Inputs (PyTorch NCW convention).
    ldesc0 = jax.random.normal(keys[0], (B, D, N), jnp.float32)
    ldesc1 = jax.random.normal(keys[1], (B, D, N), jnp.float32)
    line_enc0 = jax.random.normal(keys[2], (B, D, L2), jnp.float32)
    line_enc1 = jax.random.normal(keys[3], (B, D, L2), jnp.float32)
    idx0 = jax.random.randint(keys[4], (B, L2), 0, N, jnp.int32)
    idx1 = jax.random.randint(keys[5], (B, L2), 0, N, jnp.int32)

    # Synthetic torch-style parameters: Conv1d weight (out_ch, in_ch), bias (out_ch,).
    w1 = 0.1 * jax.random.normal(keys[6], (2 * D, 3 * D), jnp.float32)
    b1 = 0.1 * jax.random.normal(keys[7], (2 * D,), jnp.float32)
    w2 = 0.1 * jax.random.normal(keys[8], (D, 2 * D), jnp.float32)
    b2 = 0.1 * jax.random.normal(keys[9], (D,), jnp.float32)
    bn_gamma = 1.0 + 0.1 * jax.random.normal(keys[10], (2 * D,), jnp.float32)
    bn_beta = 0.1 * jax.random.normal(keys[11], (2 * D,), jnp.float32)
    bn_mean = jnp.zeros((2 * D,), jnp.float32)
    bn_var = jnp.ones((2 * D,), jnp.float32)

    torch_params = (w1, b1, bn_gamma, bn_beta, bn_mean, bn_var, w2, b2)
    folded = fold_params(w1, b1, bn_gamma, bn_beta, bn_mean, bn_var, w2, b2, D)

    out0, out1 = jax.jit(line_layer_forward)(ldesc0, ldesc1, line_enc0, line_enc1,
                                             idx0, idx1, folded)
    out0 = jax.block_until_ready(out0)
    out1 = jax.block_until_ready(out1)

    # Verify against pure-JAX reference of the PyTorch forward.
    ref0 = ref_branch(ldesc0, line_enc0, idx0, torch_params)
    ref1 = ref_branch(ldesc1, line_enc1, idx1, torch_params)
    assert out0.shape == (B, D, N) and out1.shape == (B, D, N)
    assert jnp.allclose(out0, ref0, atol=2e-4, rtol=2e-4)
    assert jnp.allclose(out1, ref1, atol=2e-4, rtol=2e-4)

    print("KERNEL_OK")
</pallas_src>

<mosaic_0001>
module attributes {stable_mosaic.version = 11 : i64} {
  func.func @line_layer_kernel(%arg0: i32, %arg1: i32, %arg2: memref<1x128x1xi32, #tpu.memory_space<vmem>>, %arg3: memref<1x32x128xf32, #tpu.memory_space<vmem>>, %arg4: memref<1x32x128xf32, #tpu.memory_space<vmem>>, %arg5: memref<64x32xf32, #tpu.memory_space<vmem>>, %arg6: memref<64x32xf32, #tpu.memory_space<vmem>>, %arg7: memref<64x32xf32, #tpu.memory_space<vmem>>, %arg8: memref<64x1xf32, #tpu.memory_space<vmem>>, %arg9: memref<32x64xf32, #tpu.memory_space<vmem>>, %arg10: memref<32x1xf32, #tpu.memory_space<vmem>>, %arg11: memref<1x32x128xf32, #tpu.memory_space<vmem>>, %arg12: memref<32x128xf32, #tpu.memory_space<vmem>>, %arg13: memref<1x128xf32, #tpu.memory_space<vmem>>) attributes {dimension_semantics = [#tpu.dimension_semantics<parallel>, #tpu.dimension_semantics<arbitrary>], iteration_bounds = array<i64: 2, 1>, scalar_prefetch = 0 : i64, scratch_operands = 2 : i64, tpu.core_type = #tpu.core_type<tc>, window_params = [{transform_indices = @transform_0, window_bounds = array<i64: 1, 128, 1>}, {transform_indices = @transform_1, window_bounds = array<i64: 1, 32, 128>}, {transform_indices = @transform_2, window_bounds = array<i64: 1, 32, 128>}, {pipeline_mode = #tpu.pipeline_mode<synchronous>, transform_indices = @transform_3, window_bounds = array<i64: 64, 32>}, {pipeline_mode = #tpu.pipeline_mode<synchronous>, transform_indices = @transform_4, window_bounds = array<i64: 64, 32>}, {pipeline_mode = #tpu.pipeline_mode<synchronous>, transform_indices = @transform_5, window_bounds = array<i64: 64, 32>}, {pipeline_mode = #tpu.pipeline_mode<synchronous>, transform_indices = @transform_6, window_bounds = array<i64: 64, 1>}, {pipeline_mode = #tpu.pipeline_mode<synchronous>, transform_indices = @transform_7, window_bounds = array<i64: 32, 64>}, {pipeline_mode = #tpu.pipeline_mode<synchronous>, transform_indices = @transform_8, window_bounds = array<i64: 32, 1>}, {transform_indices = @transform_9, window_bounds = array<i64: 1, 32, 128>}]} {
    %c0_i32 = arith.constant 0 : i32
    %0 = arith.cmpi eq, %arg1, %c0_i32 : i32
    %1 = arith.extui %0 : i1 to i32
    %c0_i32_0 = arith.constant 0 : i32
    %2 = arith.cmpi ne, %1, %c0_i32_0 : i32
    scf.if %2 {
      %cst_40 = arith.constant 0.000000e+00 : f32
      %55 = vector.broadcast %cst_40 : f32 to vector<32x128xf32>
      %c0_41 = arith.constant 0 : index
      %c0_42 = arith.constant 0 : index
      %56 = vector.load %arg12[%c0_41, %c0_42] : memref<32x128xf32, #tpu.memory_space<vmem>>, vector<32x128xf32>
      tpu.vector_store %arg12[%c0_41, %c0_42], %55 {strides = array<i32>} : memref<32x128xf32, #tpu.memory_space<vmem>>, vector<32x128xf32>,
      %cst_43 = arith.constant 0.000000e+00 : f32
      %57 = vector.broadcast %cst_43 : f32 to vector<1x128xf32>
      %c0_44 = arith.constant 0 : index
      %c0_45 = arith.constant 0 : index
      %58 = vector.load %arg13[%c0_44, %c0_45] : memref<1x128xf32, #tpu.memory_space<vmem>>, vector<1x128xf32>
      tpu.vector_store %arg13[%c0_44, %c0_45], %57 {strides = array<i32>} : memref<1x128xf32, #tpu.memory_space<vmem>>, vector<1x128xf32>,
    } else {
    }
    %c0 = arith.constant 0 : index
    %c0_1 = arith.constant 0 : index
    %c0_2 = arith.constant 0 : index
    %3 = vector.load %arg3[%c0, %c0_1, %c0_2] : memref<1x32x128xf32, #tpu.memory_space<vmem>>, vector<1x32x128xf32>
    %4 = vector.shape_cast %3 : vector<1x32x128xf32> to vector<32x128xf32>
    %c0_3 = arith.constant 0 : index
    %c0_4 = arith.constant 0 : index
    %c0_5 = arith.constant 0 : index
    %5 = vector.load %arg4[%c0_3, %c0_4, %c0_5] : memref<1x32x128xf32, #tpu.memory_space<vmem>>, vector<1x32x128xf32>
    %6 = vector.shape_cast %5 : vector<1x32x128xf32> to vector<32x128xf32>
    %c0_6 = arith.constant 0 : index
    %c0_7 = arith.constant 0 : index
    %c0_8 = arith.constant 0 : index
    %7 = vector.load %arg2[%c0_6, %c0_7, %c0_8] : memref<1x128x1xi32, #tpu.memory_space<vmem>>, vector<1x128x1xi32>
    %8 = vector.shape_cast %7 : vector<1x128x1xi32> to vector<128x1xi32>
    %9 = tpu.iota {dimensions = array<i32: 1>} : vector<128x128xi32>
    %10 = vector.broadcast %8 : vector<128x1xi32> to vector<128x128xi32>
    %11 = arith.cmpi eq, %9, %10 : vector<128x128xi32>
    %12 = arith.extui %11 : vector<128x128xi1> to vector<128x128xi32>
    %13 = arith.sitofp %12 : vector<128x128xi32> to vector<128x128xf32>
    %cst = arith.constant dense<0.000000e+00> : vector<32x128xf32>
    %14 = tpu.matmul %4, %13, %cst {dimension_numbers = #tpu.dot_dimension_numbers<[1], [1], [0], [0], [0, 0, 1, 0], [], []>} : vector<32x128xf32>, vector<128x128xf32>, vector<32x128xf32> -> vector<32x128xf32>
    %c1_i32 = arith.constant 1 : i32
    %15 = tpu.dynamic_rotate %14 by %c1_i32 dim 1 : vector<32x128xf32>, i32 -> vector<32x128xf32>
    %c127_i32 = arith.constant 127 : i32
    %16 = tpu.dynamic_rotate %14 by %c127_i32 dim 1 : vector<32x128xf32>, i32 -> vector<32x128xf32>
    %17 = tpu.iota {dimensions = array<i32: 1>} : vector<1x128xi32>
    %c1_i32_9 = arith.constant 1 : i32
    %18 = vector.broadcast %c1_i32_9 : i32 to vector<1x128xi32>
    %19 = arith.andi %17, %18 : vector<1x128xi32>
    %c0_i32_10 = arith.constant 0 : i32
    %20 = vector.broadcast %c0_i32_10 : i32 to vector<1x128xi32>
    %21 = arith.cmpi eq, %19, %20 : vector<1x128xi32>
    %22 = vector.shape_cast %21 : vector<1x128xi1> to vector<1x128xi1>
    %23 = vector.broadcast %22 : vector<1x128xi1> to vector<32x128xi1>
    %24 = arith.select %23, %16, %15 : vector<32x128xi1>, vector<32x128xf32>
    %c0_11 = arith.constant 0 : index
    %c0_12 = arith.constant 0 : index
    %25 = vector.load %arg5[%c0_11, %c0_12] : memref<64x32xf32, #tpu.memory_space<vmem>>, vector<64x32xf32>
    %cst_13 = arith.constant dense<0.000000e+00> : vector<64x128xf32>
    %26 = tpu.matmul %25, %14, %cst_13 {dimension_numbers = #tpu.dot_dimension_numbers<[1], [0], [0], [1], [0, 0, 1, 1], [], []>} : vector<64x32xf32>, vector<32x128xf32>, vector<64x128xf32> -> vector<64x128xf32>
    %c0_14 = arith.constant 0 : index
    %c0_15 = arith.constant 0 : index
    %27 = vector.load %arg6[%c0_14, %c0_15] : memref<64x32xf32, #tpu.memory_space<vmem>>, vector<64x32xf32>
    %cst_16 = arith.constant dense<0.000000e+00> : vector<64x128xf32>
    %28 = tpu.matmul %27, %24, %cst_16 {dimension_numbers = #tpu.dot_dimension_numbers<[1], [0], [0], [1], [0, 0, 1, 1], [], []>} : vector<64x32xf32>, vector<32x128xf32>, vector<64x128xf32> -> vector<64x128xf32>
    %29 = arith.addf %26, %28 : vector<64x128xf32>
    %c0_17 = arith.constant 0 : index
    %c0_18 = arith.constant 0 : index
    %30 = vector.load %arg7[%c0_17, %c0_18] : memref<64x32xf32, #tpu.memory_space<vmem>>, vector<64x32xf32>
    %cst_19 = arith.constant dense<0.000000e+00> : vector<64x128xf32>
    %31 = tpu.matmul %30, %6, %cst_19 {dimension_numbers = #tpu.dot_dimension_numbers<[1], [0], [0], [1], [0, 0, 1, 1], [], []>} : vector<64x32xf32>, vector<32x128xf32>, vector<64x128xf32> -> vector<64x128xf32>
    %32 = arith.addf %29, %31 : vector<64x128xf32>
    %c0_20 = arith.constant 0 : index
    %c0_21 = arith.constant 0 : index
    %33 = vector.load %arg8[%c0_20, %c0_21] : memref<64x1xf32, #tpu.memory_space<vmem>>, vector<64x1xf32>
    %34 = vector.broadcast %33 : vector<64x1xf32> to vector<64x128xf32>
    %35 = arith.addf %32, %34 : vector<64x128xf32>
    %cst_22 = arith.constant 0.000000e+00 : f32
    %36 = vector.broadcast %cst_22 : f32 to vector<64x128xf32>
    %37 = arith.maximumf %35, %36 : vector<64x128xf32>
    %c0_23 = arith.constant 0 : index
    %c0_24 = arith.constant 0 : index
    %38 = vector.load %arg9[%c0_23, %c0_24] : memref<32x64xf32, #tpu.memory_space<vmem>>, vector<32x64xf32>
    %cst_25 = arith.constant dense<0.000000e+00> : vector<32x128xf32>
    %39 = tpu.matmul %38, %37, %cst_25 {dimension_numbers = #tpu.dot_dimension_numbers<[1], [0], [0], [1], [0, 0, 1, 1], [], []>} : vector<32x64xf32>, vector<64x128xf32>, vector<32x128xf32> -> vector<32x128xf32>
    %c0_26 = arith.constant 0 : index
    %c0_27 = arith.constant 0 : index
    %40 = vector.load %arg10[%c0_26, %c0_27] : memref<32x1xf32, #tpu.memory_space<vmem>>, vector<32x1xf32>
    %41 = vector.broadcast %40 : vector<32x1xf32> to vector<32x128xf32>
    %42 = arith.addf %39, %41 : vector<32x128xf32>
    %c0_28 = arith.constant 0 : index
    %c0_29 = arith.constant 0 : index
    %43 = vector.load %arg12[%c0_28, %c0_29] : memref<32x128xf32, #tpu.memory_space<vmem>>, vector<32x128xf32>
    %cst_30 = arith.constant dense<0.000000e+00> : vector<32x128xf32>
    %44 = tpu.matmul %42, %13, %cst_30 {dimension_numbers = #tpu.dot_dimension_numbers<[1], [0], [0], [1], [0, 0, 1, 1], [], []>} : vector<32x128xf32>, vector<128x128xf32>, vector<32x128xf32> -> vector<32x128xf32>
    %45 = arith.addf %43, %44 : vector<32x128xf32>
    %c0_31 = arith.constant 0 : index
    %c0_32 = arith.constant 0 : index
    %46 = vector.load %arg12[%c0_31, %c0_32] : memref<32x128xf32, #tpu.memory_space<vmem>>, vector<32x128xf32>
    tpu.vector_store %arg12[%c0_31, %c0_32], %45 {strides = array<i32>} : memref<32x128xf32, #tpu.memory_space<vmem>>, vector<32x128xf32>,
    %c0_33 = arith.constant 0 : index
    %c0_34 = arith.constant 0 : index
    %47 = vector.load %arg13[%c0_33, %c0_34] : memref<1x128xf32, #tpu.memory_space<vmem>>, vector<1x128xf32>
    %cst_35 = arith.constant dense<0.000000e+00> : vector<128xf32>
    %48 = vector.multi_reduction <add>, %13, %cst_35 [0] : vector<128x128xf32> to vector<128xf32>
    %49 = vector.shape_cast %48 : vector<128xf32> to vector<1x128xf32>
    %50 = arith.addf %47, %49 : vector<1x128xf32>
    %c0_36 = arith.constant 0 : index
    %c0_37 = arith.constant 0 : index
    %51 = vector.load %arg13[%c0_36, %c0_37] : memref<1x128xf32, #tpu.memory_space<vmem>>, vector<1x128xf32>
    tpu.vector_store %arg13[%c0_36, %c0_37], %50 {strides = array<i32>} : memref<1x128xf32, #tpu.memory_space<vmem>>, vector<1x128xf32>,
    %c0_i32_38 = arith.constant 0 : i32
    %52 = arith.cmpi eq, %arg1, %c0_i32_38 : i32
    %53 = arith.extui %52 : i1 to i32
    %c0_i32_39 = arith.constant 0 : i32
    %54 = arith.cmpi ne, %53, %c0_i32_39 : i32
    scf.if %54 {
      %c0_40 = arith.constant 0 : index
      %c0_41 = arith.constant 0 : index
      %55 = vector.load %arg13[%c0_40, %c0_41] : memref<1x128xf32, #tpu.memory_space<vmem>>, vector<1x128xf32>
      %cst_42 = arith.constant 0.000000e+00 : f32
      %56 = vector.broadcast %cst_42 : f32 to vector<1x128xf32>
      %57 = arith.cmpf ogt, %55, %56 : vector<1x128xf32>
      %cst_43 = arith.constant 1.000000e+00 : f32
      %58 = vector.broadcast %cst_43 : f32 to vector<1x128xf32>
      %59 = arith.maximumf %55, %58 : vector<1x128xf32>
      %cst_44 = arith.constant 1.000000e+00 : f32
      %60 = vector.broadcast %cst_44 : f32 to vector<1x128xf32>
      %61 = arith.divf %60, %59 : vector<1x128xf32>
      %cst_45 = arith.constant 0.000000e+00 : f32
      %62 = vector.broadcast %cst_45 : f32 to vector<1x128xf32>
      %63 = arith.select %57, %61, %62 : vector<1x128xi1>, vector<1x128xf32>
      %c0_46 = arith.constant 0 : index
      %c0_47 = arith.constant 0 : index
      %64 = vector.load %arg12[%c0_46, %c0_47] : memref<32x128xf32, #tpu.memory_space<vmem>>, vector<32x128xf32>
      %65 = vector.broadcast %63 : vector<1x128xf32> to vector<32x128xf32>
      %66 = arith.mulf %64, %65 : vector<32x128xf32>
      %67 = arith.addf %4, %66 : vector<32x128xf32>
      %c0_48 = arith.constant 0 : index
      %c0_49 = arith.constant 0 : index
      %c0_50 = arith.constant 0 : index
      %68 = vector.load %arg11[%c0_48, %c0_49, %c0_50] : memref<1x32x128xf32, #tpu.memory_space<vmem>>, vector<1x32x128xf32>
      %69 = vector.shape_cast %68 : vector<1x32x128xf32> to vector<32x128xf32>
      %70 = vector.shape_cast %67 : vector<32x128xf32> to vector<1x32x128xf32>
      tpu.vector_store %arg11[%c0_48, %c0_49, %c0_50], %70 {strides = array<i32>} : memref<1x32x128xf32, #tpu.memory_space<vmem>>, vector<1x32x128xf32>,
    } else {
    }
    return
  }
  func.func @transform_0(%arg0: i32, %arg1: i32) -> (i32, i32, i32) {
    %c0_i32 = arith.constant 0 : i32
    %c0_i32_0 = arith.constant 0 : i32
    return %arg0, %arg1, %c0_i32 : i32, i32, i32
  }
  func.func @transform_1(%arg0: i32, %arg1: i32) -> (i32, i32, i32) {
    %c0_i32 = arith.constant 0 : i32
    %c0_i32_0 = arith.constant 0 : i32
    %c0_i32_1 = arith.constant 0 : i32
    return %arg0, %c0_i32, %c0_i32_0 : i32, i32, i32
  }
  func.func @transform_2(%arg0: i32, %arg1: i32) -> (i32, i32, i32) {
    %c0_i32 = arith.constant 0 : i32
    %c0_i32_0 = arith.constant 0 : i32
    return %arg0, %c0_i32, %arg1 : i32, i32, i32
  }
  func.func @transform_3(%arg0: i32, %arg1: i32) -> (i32, i32) {
    %c0_i32 = arith.constant 0 : i32
    %c0_i32_0 = arith.constant 0 : i32
    %c0_i32_1 = arith.constant 0 : i32
    return %c0_i32, %c0_i32_0 : i32, i32
  }
  func.func @transform_4(%arg0: i32, %arg1: i32) -> (i32, i32) {
    %c0_i32 = arith.constant 0 : i32
    %c0_i32_0 = arith.constant 0 : i32
    %c0_i32_1 = arith.constant 0 : i32
    return %c0_i32, %c0_i32_0 : i32, i32
  }
  func.func @transform_5(%arg0: i32, %arg1: i32) -> (i32, i32) {
    %c0_i32 = arith.constant 0 : i32
    %c0_i32_0 = arith.constant 0 : i32
    %c0_i32_1 = arith.constant 0 : i32
    return %c0_i32, %c0_i32_0 : i32, i32
  }
  func.func @transform_6(%arg0: i32, %arg1: i32) -> (i32, i32) {
    %c0_i32 = arith.constant 0 : i32
    %c0_i32_0 = arith.constant 0 : i32
    %c0_i32_1 = arith.constant 0 : i32
    return %c0_i32, %c0_i32_0 : i32, i32
  }
  func.func @transform_7(%arg0: i32, %arg1: i32) -> (i32, i32) {
    %c0_i32 = arith.constant 0 : i32
    %c0_i32_0 = arith.constant 0 : i32
    %c0_i32_1 = arith.constant 0 : i32
    return %c0_i32, %c0_i32_0 : i32, i32
  }
  func.func @transform_8(%arg0: i32, %arg1: i32) -> (i32, i32) {
    %c0_i32 = arith.constant 0 : i32
    %c0_i32_0 = arith.constant 0 : i32
    %c0_i32_1 = arith.constant 0 : i32
    return %c0_i32, %c0_i32_0 : i32, i32
  }
  func.func @transform_9(%arg0: i32, %arg1: i32) -> (i32, i32, i32) {
    %c0_i32 = arith.constant 0 : i32
    %c0_i32_0 = arith.constant 0 : i32
    %c0_i32_1 = arith.constant 0 : i32
    return %arg0, %c0_i32, %c0_i32_0 : i32, i32, i32
  }
}

</mosaic_0001>

<llo_original>
// kernel: line_layer_forward.2
$region0: #{line_layer_forward.2}
  #allocation0 [shape = 'u32[]', space=smem, size = 0x4, offset = 0x4, fixed_abs, tag = 'smem constant byte address 0x4 - core index']
  #allocation1 [shape = 'u32[72,128]{1,0:T(1,128)}', space=vmem, size = 0x9000, scoped, tag = 'internal scratch']
  #allocation2 [shape = 'f32[32,128]{1,0:T(8,128)}', space=vmem, size = 0x4000, scoped, tag = 'scratch operand']
  #allocation3 [shape = 'f32[1,128]{1,0:T(1,128)}', space=vmem, size = 0x200, scoped, tag = 'scratch operand']
  %s0 = inlined_call_operand.vmem [shape: s32[2,128,1], index: 0, kind: input, shape index: {}]
  %s1 = inlined_call_operand.vmem [shape: f32[2,32,128], index: 1, kind: input, shape index: {}]
  %s2 = inlined_call_operand.vmem [shape: f32[2,32,128], index: 2, kind: input, shape index: {}]
  %s3 = inlined_call_operand.vmem [shape: f32[64,32], index: 3, kind: input, shape index: {}]
  %s4 = inlined_call_operand.vmem [shape: f32[64,32], index: 4, kind: input, shape index: {}]
  %s5 = inlined_call_operand.vmem [shape: f32[64,32], index: 5, kind: input, shape index: {}]
  %s6 = inlined_call_operand.vmem [shape: f32[64,1], index: 6, kind: input, shape index: {}]
  %s7 = inlined_call_operand.vmem [shape: f32[32,64], index: 7, kind: input, shape index: {}]
  %s8 = inlined_call_operand.vmem [shape: f32[32,1], index: 8, kind: input, shape index: {}]
  %s9 = inlined_call_operand.vmem [shape: f32[2,32,128], index: 9, kind: output, shape index: {}]
  %s10 = sld [smem:[#allocation0]]
  $region77: #{line_layer_forward.2} parent=0
    _
  %s12 = ssub.s32 1, %s10
  %s13 = scalar_select 0, %s12, %s10
  loop: start=0, step=1, limit=4
  $region2: #{line_layer_forward.2} parent=0 // loop_pre_header
    _
  $region3: #{line_layer_forward.2} parent=0 // loop_header
    %s15 = sphi 0, %s19
    %p16 = scmp.ge.s32.totalorder %s15, 4
    %s22 = sphi 0, %s34
    %s23 = sphi 0, %s30
    %s24 = sphi 0, %s22
    %s25 = sphi 0, %s23
    %s26 = sphi 0, %s24
    %s27 = sphi 0, %s25
    %s39 = sphi 0, %s41
    %s42 = sphi 0, %s39
    %s43 = sphi 0, %s42
    %s59 = sphi 0, %s43
    %s65 = sphi 0, %s67
    %s68 = sphi 0, %s65
    %s69 = sphi 0, %s68
    %s85 = sphi 0, %s69
    %s93 = sphi 0, %s95
    %s96 = sphi 0, %s93
    %s97 = sphi 0, %s96
    %s113 = sphi 0, %s97
    %s117 = sphi 0, %s117
    %s119 = sphi 0, %s117
    %s120 = sphi 0, %s119
    %s134 = sphi 0, %s120
    %s138 = sphi 0, %s138
    %s140 = sphi 0, %s138
    %s141 = sphi 0, %s140
    %s155 = sphi 0, %s141
    %s159 = sphi 0, %s159
    %s161 = sphi 0, %s159
    %s162 = sphi 0, %s161
    %s176 = sphi 0, %s162
    %s180 = sphi 0, %s180
    %s182 = sphi 0, %s180
    %s183 = sphi 0, %s182
    %s197 = sphi 0, %s183
    %s201 = sphi 0, %s201
    %s203 = sphi 0, %s201
    %s204 = sphi 0, %s203
    %s218 = sphi 0, %s204
    %s222 = sphi 0, %s222
    %s224 = sphi 0, %s222
    %s225 = sphi 0, %s224
    %s239 = sphi 0, %s225
    %s245 = sphi 0, %s247
    %s248 = sphi 0, %s245
    %s249 = sphi 0, %s248
    %s265 = sphi 0, %s249
  $region4: #{line_layer_forward.2} parent=0 // loop_header_branch
    %18 = sbr.rel (%p16) target = $region8
  $region5: #{line_layer_forward.2} parent=0 // loop_body
    %s20 = ssub.s32 %s15, 1
    %s21 = ssub.s32 %s15, 2
    %s28 = sadd.s32 1, %s23
    %p29 = scmp.ge.s32.totalorder %s28, 1
    %s30 = scalar_select %p29, 0, %s28
    %s31 = sadd.s32 1, %s22
    %s32 = scalar_select %p29, %s31, %s22
    %p33 = scmp.ge.s32.totalorder %s32, 2
    %s34 = scalar_select %p33, 0, %s32
    %s35 = ssub.s32 %s22, %s34
    %s36 = ssub.s32 %s23, %s30
    %s37 = sor.u32 %s35, %s36
    %p38 = scmp.eq.s32.totalorder %s37, 0
    %s40 = sadd.s32 %s39, 1
    %s41 = scalar_select %p38, %s39, %s40
    %p44 = pneg %p38
    %p45 = scmp.eq.s32.totalorder %s15, 1
    %p46 = por %p44, %p45
    %p47 = scmp.ne.s32.totalorder %s39, %s42
    %p48 = scmp.eq.s32.totalorder %s15, 0
    %p49 = por %p47, %p48
    %p50 = scmp.ne.s32.totalorder %s39, %s42
    %p51 = scmp.eq.s32.totalorder %s20, 1
    %p52 = por %p50, %p51
    %p53 = scmp.ne.s32.totalorder %s42, %s43
    %p54 = scmp.eq.s32.totalorder %s20, 0
    %p55 = por %p53, %p54
    %p56 = scmp.ne.s32.totalorder %s42, %s43
    %p57 = scmp.eq.s32.totalorder %s21, 1
    %p58 = por %p56, %p57
    %p60 = scmp.ne.s32.totalorder %s43, %s59
    %p61 = scmp.eq.s32.totalorder %s21, 0
    %p62 = por %p60, %p61
    %s63 = ssub.s32 %s22, %s34
    %p64 = scmp.eq.s32.totalorder %s63, 0
    %s66 = sadd.s32 %s65, 1
    %s67 = scalar_select %p64, %s65, %s66
    %p70 = pneg %p64
    %p71 = scmp.eq.s32.totalorder %s15, 1
    %p72 = por %p70, %p71
    %p73 = scmp.ne.s32.totalorder %s65, %s68
    %p74 = scmp.eq.s32.totalorder %s15, 0
    %p75 = por %p73, %p74
    %p76 = scmp.ne.s32.totalorder %s65, %s68
    %p77 = scmp.eq.s32.totalorder %s20, 1
    %p78 = por %p76, %p77
    %p79 = scmp.ne.s32.totalorder %s68, %s69
    %p80 = scmp.eq.s32.totalorder %s20, 0
    %p81 = por %p79, %p80
    %p82 = scmp.ne.s32.totalorder %s68, %s69
    %p83 = scmp.eq.s32.totalorder %s21, 1
    %p84 = por %p82, %p83
    %p86 = scmp.ne.s32.totalorder %s69, %s85
    %p87 = scmp.eq.s32.totalorder %s21, 0
    %p88 = por %p86, %p87
    %s89 = ssub.s32 %s22, %s34
    %s90 = ssub.s32 %s23, %s30
    %s91 = sor.u32 %s89, %s90
    %p92 = scmp.eq.s32.totalorder %s91, 0
    %s94 = sadd.s32 %s93, 1
    %s95 = scalar_select %p92, %s93, %s94
    %p98 = pneg %p92
    %p99 = scmp.eq.s32.totalorder %s15, 1
    %p100 = por %p98, %p99
    %p101 = scmp.ne.s32.totalorder %s93, %s96
    %p102 = scmp.eq.s32.totalorder %s15, 0
    %p103 = por %p101, %p102
    %p104 = scmp.ne.s32.totalorder %s93, %s96
    %p105 = scmp.eq.s32.totalorder %s20, 1
    %p106 = por %p104, %p105
    %p107 = scmp.ne.s32.totalorder %s96, %s97
    %p108 = scmp.eq.s32.totalorder %s20, 0
    %p109 = por %p107, %p108
    %p110 = scmp.ne.s32.totalorder %s96, %s97
    %p111 = scmp.eq.s32.totalorder %s21, 1
    %p112 = por %p110, %p111
    %p114 = scmp.ne.s32.totalorder %s97, %s113
    %p115 = scmp.eq.s32.totalorder %s21, 0
    %p116 = por %p114, %p115
    %s118 = sadd.s32 %s117, 1
    %p121 = scmp.eq.s32.totalorder %s15, 1
    %p122 = scmp.ne.s32.totalorder %s117, %s119
    %p123 = scmp.eq.s32.totalorder %s15, 0
    %p124 = por %p122, %p123
    %p125 = scmp.ne.s32.totalorder %s117, %s119
    %p126 = scmp.eq.s32.totalorder %s20, 1
    %p127 = por %p125, %p126
    %p128 = scmp.ne.s32.totalorder %s119, %s120
    %p129 = scmp.eq.s32.totalorder %s20, 0
    %p130 = por %p128, %p129
    %p131 = scmp.ne.s32.totalorder %s119, %s120
    %p132 = scmp.eq.s32.totalorder %s21, 1
    %p133 = por %p131, %p132
    %p135 = scmp.ne.s32.totalorder %s120, %s134
    %p136 = scmp.eq.s32.totalorder %s21, 0
    %p137 = por %p135, %p136
    %s139 = sadd.s32 %s138, 1
    %p142 = scmp.eq.s32.totalorder %s15, 1
    %p143 = scmp.ne.s32.totalorder %s138, %s140
    %p144 = scmp.eq.s32.totalorder %s15, 0
    %p145 = por %p143, %p144
    %p146 = scmp.ne.s32.totalorder %s138, %s140
    %p147 = scmp.eq.s32.totalorder %s20, 1
    %p148 = por %p146, %p147
    %p149 = scmp.ne.s32.totalorder %s140, %s141
    %p150 = scmp.eq.s32.totalorder %s20, 0
    %p151 = por %p149, %p150
    %p152 = scmp.ne.s32.totalorder %s140, %s141
    %p153 = scmp.eq.s32.totalorder %s21, 1
    %p154 = por %p152, %p153
    %p156 = scmp.ne.s32.totalorder %s141, %s155
    %p157 = scmp.eq.s32.totalorder %s21, 0
    %p158 = por %p156, %p157
    %s160 = sadd.s32 %s159, 1
    %p163 = scmp.eq.s32.totalorder %s15, 1
    %p164 = scmp.ne.s32.totalorder %s159, %s161
    %p165 = scmp.eq.s32.totalorder %s15, 0
    %p166 = por %p164, %p165
    %p167 = scmp.ne.s32.totalorder %s159, %s161
    %p168 = scmp.eq.s32.totalorder %s20, 1
    %p169 = por %p167, %p168
    %p170 = scmp.ne.s32.totalorder %s161, %s162
    %p171 = scmp.eq.s32.totalorder %s20, 0
    %p172 = por %p170, %p171
    %p173 = scmp.ne.s32.totalorder %s161, %s162
    %p174 = scmp.eq.s32.totalorder %s21, 1
    %p175 = por %p173, %p174
    %p177 = scmp.ne.s32.totalorder %s162, %s176
    %p178 = scmp.eq.s32.totalorder %s21, 0
    %p179 = por %p177, %p178
    %s181 = sadd.s32 %s180, 1
    %p184 = scmp.eq.s32.totalorder %s15, 1
    %p185 = scmp.ne.s32.totalorder %s180, %s182
    %p186 = scmp.eq.s32.totalorder %s15, 0
    %p187 = por %p185, %p186
    %p188 = scmp.ne.s32.totalorder %s180, %s182
    %p189 = scmp.eq.s32.totalorder %s20, 1
    %p190 = por %p188, %p189
    %p191 = scmp.ne.s32.totalorder %s182, %s183
    %p192 = scmp.eq.s32.totalorder %s20, 0
    %p193 = por %p191, %p192
    %p194 = scmp.ne.s32.totalorder %s182, %s183
    %p195 = scmp.eq.s32.totalorder %s21, 1
    %p196 = por %p194, %p195
    %p198 = scmp.ne.s32.totalorder %s183, %s197
    %p199 = scmp.eq.s32.totalorder %s21, 0
    %p200 = por %p198, %p199
    %s202 = sadd.s32 %s201, 1
    %p205 = scmp.eq.s32.totalorder %s15, 1
    %p206 = scmp.ne.s32.totalorder %s201, %s203
    %p207 = scmp.eq.s32.totalorder %s15, 0
    %p208 = por %p206, %p207
    %p209 = scmp.ne.s32.totalorder %s201, %s203
    %p210 = scmp.eq.s32.totalorder %s20, 1
    %p211 = por %p209, %p210
    %p212 = scmp.ne.s32.totalorder %s203, %s204
    %p213 = scmp.eq.s32.totalorder %s20, 0
    %p214 = por %p212, %p213
    %p215 = scmp.ne.s32.totalorder %s203, %s204
    %p216 = scmp.eq.s32.totalorder %s21, 1
    %p217 = por %p215, %p216
    %p219 = scmp.ne.s32.totalorder %s204, %s218
    %p220 = scmp.eq.s32.totalorder %s21, 0
    %p221 = por %p219, %p220
    %s223 = sadd.s32 %s222, 1
    %p226 = scmp.eq.s32.totalorder %s15, 1
    %p227 = scmp.ne.s32.totalorder %s222, %s224
    %p228 = scmp.eq.s32.totalorder %s15, 0
    %p229 = por %p227, %p228
    %p230 = scmp.ne.s32.totalorder %s222, %s224
    %p231 = scmp.eq.s32.totalorder %s20, 1
    %p232 = por %p230, %p231
    %p233 = scmp.ne.s32.totalorder %s224, %s225
    %p234 = scmp.eq.s32.totalorder %s20, 0
    %p235 = por %p233, %p234
    %p236 = scmp.ne.s32.totalorder %s224, %s225
    %p237 = scmp.eq.s32.totalorder %s21, 1
    %p238 = por %p236, %p237
    %p240 = scmp.ne.s32.totalorder %s225, %s239
    %p241 = scmp.eq.s32.totalorder %s21, 0
    %p242 = por %p240, %p241
    %s243 = ssub.s32 %s22, %s34
    %p244 = scmp.eq.s32.totalorder %s243, 0
    %s246 = sadd.s32 %s245, 1
    %s247 = scalar_select %p244, %s245, %s246
    %p250 = pneg %p244
    %p251 = scmp.eq.s32.totalorder %s15, 1
    %p252 = por %p250, %p251
    %p253 = scmp.ne.s32.totalorder %s245, %s248
    %p254 = scmp.eq.s32.totalorder %s15, 0
    %p255 = por %p253, %p254
    %p256 = scmp.ne.s32.totalorder %s245, %s248
    %p257 = scmp.eq.s32.totalorder %s20, 1
    %p258 = por %p256, %p257
    %p259 = scmp.ne.s32.totalorder %s248, %s249
    %p260 = scmp.eq.s32.totalorder %s20, 0
    %p261 = por %p259, %p260
    %p262 = scmp.ne.s32.totalorder %s248, %s249
    %p263 = scmp.eq.s32.totalorder %s21, 1
    %p264 = por %p262, %p263
    %p266 = scmp.ne.s32.totalorder %s249, %s265
    %p267 = scmp.eq.s32.totalorder %s21, 0
    %p268 = por %p266, %p267
    %p269 = scmp.le.s32.totalorder 1, %s15
    %p270 = scmp.lt.s32.totalorder %s15, 3
    %p271 = pnand %p269, %p270
    %p272 = pneg %p271
    // Predicated region
    $region9: #{line_layer_forward.2} parent=5 // pred_check
      _
    $region10: #{line_layer_forward.2} parent=5 // pred_check_branch
      %274 = sbr.rel (%p271) target = $region12
    $region11: #{line_layer_forward.2} parent=5 // pred_region
      %s275 = ssub.s32 %s15, 1
      // Predicated region
      $region13: #{line_layer_forward.2} parent=11 // pred_check
        %p276 = pneg %p130
      $region14: #{line_layer_forward.2} parent=11 // pred_check_branch
        %278 = sbr.rel (%p276) target = $region16
      $region15: #{line_layer_forward.2} parent=11 // pred_region
        _
      $region16: #{line_layer_forward.2} parent=11 // pred_fallthru
        _
      // Predicated region
      $region17: #{line_layer_forward.2} parent=11 // pred_check
        %p279 = pneg %p151
      $region18: #{line_layer_forward.2} parent=11 // pred_check_branch
        %281 = sbr.rel (%p279) target = $region20
      $region19: #{line_layer_forward.2} parent=11 // pred_region
        _
      $region20: #{line_layer_forward.2} parent=11 // pred_fallthru
        _
      // Predicated region
      $region21: #{line_layer_forward.2} parent=11 // pred_check
        %p282 = pneg %p172
      $region22: #{line_layer_forward.2} parent=11 // pred_check_branch
        %284 = sbr.rel (%p282) target = $region24
      $region23: #{line_layer_forward.2} parent=11 // pred_region
        _
      $region24: #{line_layer_forward.2} parent=11 // pred_fallthru
        _
      // Predicated region
      $region25: #{line_layer_forward.2} parent=11 // pred_check
        %p285 = pneg %p193
      $region26: #{line_layer_forward.2} parent=11 // pred_check_branch
        %287 = sbr.rel (%p285) target = $region28
      $region27: #{line_layer_forward.2} parent=11 // pred_region
        _
      $region28: #{line_layer_forward.2} parent=11 // pred_fallthru
        _
      // Predicated region
      $region29: #{line_layer_forward.2} parent=11 // pred_check
        %p288 = pneg %p214
      $region30: #{line_layer_forward.2} parent=11 // pred_check_branch
        %290 = sbr.rel (%p288) target = $region32
      $region31: #{line_layer_forward.2} parent=11 // pred_region
        _
      $region32: #{line_layer_forward.2} parent=11 // pred_fallthru
        _
      // Predicated region
      $region33: #{line_layer_forward.2} parent=11 // pred_check
        %p291 = pneg %p235
      $region34: #{line_layer_forward.2} parent=11 // pred_check_branch
        %293 = sbr.rel (%p291) target = $region36
      $region35: #{line_layer_forward.2} parent=11 // pred_region
        _
      $region36: #{line_layer_forward.2} parent=11 // pred_fallthru
        _
    $region12: #{line_layer_forward.2} parent=5 // pred_fallthru
      _
    %p294 = scmp.lt.s32.totalorder %s15, 2
    // Predicated region
    $region37: #{line_layer_forward.2} parent=5 // pred_check
      %p295 = pneg %p294
    $region38: #{line_layer_forward.2} parent=5 // pred_check_branch
      %297 = sbr.rel (%p295) target = $region40
    $region39: #{line_layer_forward.2} parent=5 // pred_region
      // Predicated region
      $region41: #{line_layer_forward.2} parent=39 // pred_check
        %p298 = pneg %p49
      $region42: #{line_layer_forward.2} parent=39 // pred_check_branch
        %300 = sbr.rel (%p298) target = $region44
      $region43: #{line_layer_forward.2} parent=39 // pred_region
        %s301 = smul.u32 16, %s23
        %p302 = scmp.lt.s32.totalorder %s22, 1
        %s303 = scalar_select %p302, %s22, 1
        %p304 = scmp.lt.s32.totalorder %s301, 15
        %s305 = scalar_select %p304, %s301, 15
        %s306 = smul.addr %s303, 16
        %s307 = sadd.s32 %s305, %s306
        %s308 = smul.addr %s307, 8
        %s309 = scalar_lea.vmem %s0, %s308
        %s310 = smul.u32 16, %s23
      $region44: #{line_layer_forward.2} parent=39 // pred_fallthru
        _
      // Predicated region
      $region45: #{line_layer_forward.2} parent=39 // pred_check
        %p311 = pneg %p75
      $region46: #{line_layer_forward.2} parent=39 // pred_check_branch
        %313 = sbr.rel (%p311) target = $region48
      $region47: #{line_layer_forward.2} parent=39 // pred_region
        %p314 = scmp.lt.s32.totalorder %s22, 1
        %s315 = scalar_select %p314, %s22, 1
        %s316 = smul.addr %s315, 4
        %s317 = smul.addr %s316, 8
        %s318 = scalar_lea.vmem %s1, %s317
      $region48: #{line_layer_forward.2} parent=39 // pred_fallthru
        _
      // Predicated region
      $region49: #{line_layer_forward.2} parent=39 // pred_check
        %p319 = pneg %p103
      $region50: #{line_layer_forward.2} parent=39 // pred_check_branch
        %321 = sbr.rel (%p319) target = $region52
      $region51: #{line_layer_forward.2} parent=39 // pred_region
        %p322 = scmp.lt.s32.totalorder %s22, 1
        %s323 = scalar_select %p322, %s22, 1
        %p324 = scmp.lt.s32.totalorder %s23, 0
        %s325 = scalar_select %p324, %s23, 0
        %s326 = smul.addr %s323, 4
        %s327 = sadd.s32 %s325, %s326
        %s328 = smul.addr %s327, 8
        %s329 = scalar_lea.vmem %s2, %s328
      $region52: #{line_layer_forward.2} parent=39 // pred_fallthru
        _
    $region40: #{line_layer_forward.2} parent=5 // pred_fallthru
      _
    %p330 = scmp.le.s32.totalorder 1, %s15
    %p331 = scmp.lt.s32.totalorder %s15, 3
    %p332 = pnand %p330, %p331
    %p333 = pneg %p332
    // Predicated region
    $region53: #{line_layer_forward.2} parent=5 // pred_check
      _
    $region54: #{line_layer_forward.2} parent=5 // pred_check_branch
      %335 = sbr.rel (%p332) target = $region56
    $region55: #{line_layer_forward.2} parent=5 // pred_region
      %s336 = ssub.s32 %s15, 1
      %s337 = smul.u32 16, %s25
      %p338 = scmp.lt.s32.totalorder %s24, 1
      %s339 = scalar_select %p338, %s24, 1
      %p340 = scmp.lt.s32.totalorder %s337, 15
      %s341 = scalar_select %p340, %s337, 15
      %s342 = smul.addr %s339, 16
      %s343 = sadd.s32 %s341, %s342
      %s344 = smul.addr %s343, 8
      %s345 = scalar_lea.vmem %s0, %s344
      %p346 = pneg %p55
      %p347 = pneg %p52
      %p348 = scmp.lt.s32.totalorder %s24, 1
      %s349 = scalar_select %p348, %s24, 1
      %s350 = smul.addr %s349, 4
      %s351 = smul.addr %s350, 8
      %s352 = scalar_lea.vmem %s1, %s351
      %p353 = pneg %p81
      %p354 = pneg %p78
      %p355 = scmp.lt.s32.totalorder %s24, 1
      %s356 = scalar_select %p355, %s24, 1
      %p357 = scmp.lt.s32.totalorder %s25, 0
      %s358 = scalar_select %p357, %s25, 0
      %s359 = smul.addr %s356, 4
      %s360 = sadd.s32 %s358, %s359
      %s361 = smul.addr %s360, 8
      %s362 = scalar_lea.vmem %s2, %s361
      %p363 = pneg %p109
      %p364 = pneg %p106
      %p365 = pneg %p130
      %p366 = pneg %p127
      %p367 = pneg %p151
      %p368 = pneg %p148
      %p369 = pneg %p172
      %p370 = pneg %p169
      %p371 = pneg %p193
      %p372 = pneg %p190
      %p373 = pneg %p214
      %p374 = pneg %p211
      %p375 = pneg %p235
      %p376 = pneg %p232
      %p377 = pneg %p261
      %p378 = pneg %p258
      %p379 = scmp.lt.s32.totalorder %s24, 1
      %s380 = scalar_select %p379, %s24, 1
      %s381 = smul.addr %s380, 4
      %s382 = smul.addr %s381, 8
      %s383 = scalar_lea.vmem %s9, %s382
      %s384 = smul.u32 16, %s25
      %p385 = scmp.lt.s32.totalorder %s24, 1
      %s386 = scalar_select %p385, %s24, 1
      %p387 = scmp.lt.s32.totalorder %s384, 15
      %s388 = scalar_select %p387, %s384, 15
      %s389 = smul.addr %s386, 16
      %s390 = sadd.s32 %s388, %s389
      %s391 = smul.addr %s390, 8
      %s392 = scalar_lea.vmem %s0, %s391
      %s393 = smul.u32 16, %s25
      %p394 = scmp.lt.s32.totalorder %s24, 1
      %s395 = scalar_select %p394, %s24, 1
      %s396 = smul.addr %s395, 4
      %s397 = smul.addr %s396, 8
      %s398 = scalar_lea.vmem %s1, %s397
      %p399 = scmp.lt.s32.totalorder %s24, 1
      %s400 = scalar_select %p399, %s24, 1
      %p401 = scmp.lt.s32.totalorder %s25, 0
      %s402 = scalar_select %p401, %s25, 0
      %s403 = smul.addr %s400, 4
      %s404 = sadd.s32 %s402, %s403
      %s405 = smul.addr %s404, 8
      %s406 = scalar_lea.vmem %s2, %s405
      %p407 = scmp.lt.s32.totalorder %s24, 1
      %s408 = scalar_select %p407, %s24, 1
      %s409 = smul.addr %s408, 4
      %s410 = smul.addr %s409, 8
      %s411 = scalar_lea.vmem %s9, %s410
      %p412 = scmp.eq.s32.totalorder %s25, 0
      // Predicated region
      $region57: #{line_layer_forward.2} parent=55 // pred_check
        %p413 = pneg %p412
      $region58: #{line_layer_forward.2} parent=55 // pred_check_branch
        %415 = sbr.rel (%p413) target = $region60
      $region59: #{line_layer_forward.2} parent=55 // pred_region
        %416 = vst [vmem:[#allocation2] sm:$0xff] 0.0
        %417 = vst [vmem:[#allocation2 + $0x8] sm:$0xff] 0.0
        %418 = vst [vmem:[#allocation2 + $0x10] sm:$0xff] 0.0
        %419 = vst [vmem:[#allocation2 + $0x18] sm:$0xff] 0.0
        %420 = vst [vmem:[#allocation3] sm:$0x1] 0.0
      $region60: #{line_layer_forward.2} parent=55 // pred_fallthru
        _
      %v421 = vld [vmem:[%s398] sm:$0xff]
      %v422 = vld [vmem:[%s398 + $0x8] sm:$0xff]
      %v423 = vld [vmem:[%s398 + $0x10] sm:$0xff]
      %v424 = vld [vmem:[%s398 + $0x18] sm:$0xff]
      %v425 = vld [vmem:[%s406] sm:$0xff]
      %v426 = vld [vmem:[%s406 + $0x8] sm:$0xff]
      %v427 = vld [vmem:[%s406 + $0x10] sm:$0xff]
      %v428 = vld [vmem:[%s406 + $0x18] sm:$0xff]
      %v429 = vld [vmem:[%s392] sm:$0xff]
      %v430 = vld [vmem:[%s392 + $0x8] sm:$0xff]
      %v431 = vld [vmem:[%s392 + $0x10] sm:$0xff]
      %v432 = vld [vmem:[%s392 + $0x18] sm:$0xff]
      %v433 = vld [vmem:[%s392 + $0x20] sm:$0xff]
      %v434 = vld [vmem:[%s392 + $0x28] sm:$0xff]
      %v435 = vld [vmem:[%s392 + $0x30] sm:$0xff]
      %v436 = vld [vmem:[%s392 + $0x38] sm:$0xff]
      %v437 = vld [vmem:[%s392 + $0x40] sm:$0xff]
      %v438 = vld [vmem:[%s392 + $0x48] sm:$0xff]
      %v439 = vld [vmem:[%s392 + $0x50] sm:$0xff]
      %v440 = vld [vmem:[%s392 + $0x58] sm:$0xff]
      %v441 = vld [vmem:[%s392 + $0x60] sm:$0xff]
      %v442 = vld [vmem:[%s392 + $0x68] sm:$0xff]
      %v443 = vld [vmem:[%s392 + $0x70] sm:$0xff]
      %v444 = vld [vmem:[%s392 + $0x78] sm:$0xff]
      %v445 = vlaneseq
      %v446 = vand.u32 %v445, 127
      %447 = vset.pattern.permute.xlu0 0
      %448 = vperm.xlu0 %447, %v429
      %v449 = vpop.permute.xlu0 %448
      %450 = vset.pattern.permute.xlu0 0
      %451 = vperm.xlu0 %450, %v430
      %v452 = vpop.permute.xlu0 %451
      %453 = vset.pattern.permute.xlu0 0
      %454 = vperm.xlu0 %453, %v431
      %v455 = vpop.permute.xlu0 %454
      %456 = vset.pattern.permute.xlu0 0
      %457 = vperm.xlu0 %456, %v432
      %v458 = vpop.permute.xlu0 %457
      %459 = vset.pattern.permute.xlu0 0
      %460 = vperm.xlu0 %459, %v433
      %v461 = vpop.permute.xlu0 %460
      %462 = vset.pattern.permute.xlu0 0
      %463 = vperm.xlu0 %462, %v434
      %v464 = vpop.permute.xlu0 %463
      %465 = vset.pattern.permute.xlu0 0
      %466 = vperm.xlu0 %465, %v435
      %v467 = vpop.permute.xlu0 %466
      %468 = vset.pattern.permute.xlu0 0
      %469 = vperm.xlu0 %468, %v436
      %v470 = vpop.permute.xlu0 %469
      %471 = vset.pattern.permute.xlu0 0
      %472 = vperm.xlu0 %471, %v437
      %v473 = vpop.permute.xlu0 %472
      %474 = vset.pattern.permute.xlu0 0
      %475 = vperm.xlu0 %474, %v438
      %v476 = vpop.permute.xlu0 %475
      %477 = vset.pattern.permute.xlu0 0
      %478 = vperm.xlu0 %477, %v439
      %v479 = vpop.permute.xlu0 %478
      %480 = vset.pattern.permute.xlu0 0
      %481 = vperm.xlu0 %480, %v440
      %v482 = vpop.permute.xlu0 %481
      %483 = vset.pattern.permute.xlu0 0
      %484 = vperm.xlu0 %483, %v441
      %v485 = vpop.permute.xlu0 %484
      %486 = vset.pattern.permute.xlu0 0
      %487 = vperm.xlu0 %486, %v442
      %v488 = vpop.permute.xlu0 %487
      %489 = vset.pattern.permute.xlu0 0
      %490 = vperm.xlu0 %489, %v443
      %v491 = vpop.permute.xlu0 %490
      %492 = vset.pattern.permute.xlu0 0
      %493 = vperm.xlu0 %492, %v444
      %v494 = vpop.permute.xlu0 %493
      %vm495 = vcmp.eq.s32.totalorder %v446, %v449
      %vm496 = vcmp.eq.s32.totalorder %v446, %v452
      %vm497 = vcmp.eq.s32.totalorder %v446, %v455
      %vm498 = vcmp.eq.s32.totalorder %v446, %v458
      %vm499 = vcmp.eq.s32.totalorder %v446, %v461
      %vm500 = vcmp.eq.s32.totalorder %v446, %v464
      %vm501 = vcmp.eq.s32.totalorder %v446, %v467
      %vm502 = vcmp.eq.s32.totalorder %v446, %v470
      %vm503 = vcmp.eq.s32.totalorder %v446, %v473
      %vm504 = vcmp.eq.s32.totalorder %v446, %v476
      %vm505 = vcmp.eq.s32.totalorder %v446, %v479
      %vm506 = vcmp.eq.s32.totalorder %v446, %v482
      %vm507 = vcmp.eq.s32.totalorder %v446, %v485
      %vm508 = vcmp.eq.s32.totalorder %v446, %v488
      %vm509 = vcmp.eq.s32.totalorder %v446, %v491
      %vm510 = vcmp.eq.s32.totalorder %v446, %v494
      %v511 = vsel %vm495, 1, 0
      %v512 = vsel %vm496, 1, 0
      %v513 = vsel %vm497, 1, 0
      %v514 = vsel %vm498, 1, 0
      %v515 = vsel %vm499, 1, 0
      %v516 = vsel %vm500, 1, 0
      %v517 = vsel %vm501, 1, 0
      %v518 = vsel %vm502, 1, 0
      %v519 = vsel %vm503, 1, 0
      %v520 = vsel %vm504, 1, 0
      %v521 = vsel %vm505, 1, 0
      %v522 = vsel %vm506, 1, 0
      %v523 = vsel %vm507, 1, 0
      %v524 = vsel %vm508, 1, 0
      %v525 = vsel %vm509, 1, 0
      %v526 = vsel %vm510, 1, 0
      %v527 = vcvt.s32.f32 %v511
      %v528 = vcvt.s32.f32 %v512
      %v529 = vcvt.s32.f32 %v513
      %v530 = vcvt.s32.f32 %v514
      %v531 = vcvt.s32.f32 %v515
      %v532 = vcvt.s32.f32 %v516
      %v533 = vcvt.s32.f32 %v517
      %v534 = vcvt.s32.f32 %v518
      %v535 = vcvt.s32.f32 %v519
      %v536 = vcvt.s32.f32 %v520
      %v537 = vcvt.s32.f32 %v521
      %v538 = vcvt.s32.f32 %v522
      %v539 = vcvt.s32.f32 %v523
      %v540 = vcvt.s32.f32 %v524
      %v541 = vcvt.s32.f32 %v525
      %v542 = vcvt.s32.f32 %v526
      %543 = vmatpush.xpose.msra.mxu0 %v542
      %544 = vmatpush.xpose.msra.mxu0 %v541
      %545 = vmatpush.xpose.msra.mxu0 %v540
      %546 = vmatpush.xpose.msra.mxu0 %v539
      %547 = vmatpush.xpose.msra.mxu0 %v538
      %548 = vmatpush.xpose.msra.mxu0 %v537
      %549 = vmatpush.xpose.msra.mxu0 %v536
      %550 = vmatpush.xpose.msra.mxu0 %v535
      %551 = vmatpush.xpose.msra.mxu0 %v534
      %552 = vmatpush.xpose.msra.mxu0 %v533
      %553 = vmatpush.xpose.msra.mxu0 %v532
      %554 = vmatpush.xpose.msra.mxu0 %v531
      %555 = vmatpush.xpose.msra.mxu0 %v530
      %556 = vmatpush.xpose.msra.mxu0 %v529
      %557 = vmatpush.xpose.msra.mxu0 %v528
      %558 = vmatpush.xpose.msra.mxu0 %v527
      %559 = vmatmul.f32.gmra.mxu0 %v421
      %v560 = vpop.f32.mrf.mxu0
      %v561 = vadd.f32 0.0, %v560
      %562 = vmatmul.f32.gmra.mxu0 %v422
      %v563 = vpop.f32.mrf.mxu0
      %v564 = vadd.f32 0.0, %v563
      %565 = vmatmul.f32.gmra.mxu0 %v423
      %v566 = vpop.f32.mrf.mxu0
      %v567 = vadd.f32 0.0, %v566
      %568 = vmatmul.f32.gmra.mxu0 %v424
      %v569 = vpop.f32.mrf.mxu0
      %v570 = vadd.f32 0.0, %v569
      %571 = vdwg.mxu0
      %572 = vrot.lane.b32.xlu0 %v561, 1
      %v573 = vpop.permute.xlu0 %572
      %574 = vrot.lane.b32.xlu0 %v564, 1
      %v575 = vpop.permute.xlu0 %574
      %576 = vrot.lane.b32.xlu0 %v567, 1
      %v577 = vpop.permute.xlu0 %576
      %578 = vrot.lane.b32.xlu0 %v570, 1
      %v579 = vpop.permute.xlu0 %578
      %580 = vrot.lane.b32.xlu0 %v561, 127
      %v581 = vpop.permute.xlu0 %580
      %582 = vrot.lane.b32.xlu0 %v564, 127
      %v583 = vpop.permute.xlu0 %582
      %584 = vrot.lane.b32.xlu0 %v567, 127
      %v585 = vpop.permute.xlu0 %584
      %586 = vrot.lane.b32.xlu0 %v570, 127
      %v587 = vpop.permute.xlu0 %586
      %v588 = vand.u32 %v446, 1
      %vm589 = vcmp.eq.s32.totalorder %v588, 0
      %v590 = vsel %vm589, 1, 0
      %vm591 = vcmp.eq.s32.totalorder %v590, 1
      %v592 = vsel %vm591, %v581, %v573
      %v593 = vsel %vm591, %v583, %v575
      %v594 = vsel %vm591, %v585, %v577
      %v595 = vsel %vm591, %v587, %v579
      %v596 = vld [vmem:[%s3] sm:$0xff]
      %v597 = vld [vmem:[%s3 + $0x8] sm:$0xff]
      %v598 = vld [vmem:[%s3 + $0x10] sm:$0xff]
      %v599 = vld [vmem:[%s3 + $0x18] sm:$0xff]
      %v600 = vld [vmem:[%s3 + $0x20] sm:$0xff]
      %v601 = vld [vmem:[%s3 + $0x28] sm:$0xff]
      %v602 = vld [vmem:[%s3 + $0x30] sm:$0xff]
      %v603 = vld [vmem:[%s3 + $0x38] sm:$0xff]
      %v604 = vld [vmem:[%s4] sm:$0xff]
      %v605 = vld [vmem:[%s4 + $0x8] sm:$0xff]
      %v606 = vld [vmem:[%s4 + $0x10] sm:$0xff]
      %v607 = vld [vmem:[%s4 + $0x18] sm:$0xff]
      %v608 = vld [vmem:[%s4 + $0x20] sm:$0xff]
      %v609 = vld [vmem:[%s4 + $0x28] sm:$0xff]
      %v610 = vld [vmem:[%s4 + $0x30] sm:$0xff]
      %v611 = vld [vmem:[%s4 + $0x38] sm:$0xff]
      %vm612 = vcmask 261120
      %v614 = vsel %vm612, %v604, 0
      %v617 = vsel %vm612, %v605, 0
      %v620 = vsel %vm612, %v606, 0
      %v623 = vsel %vm612, %v607, 0
      %v626 = vsel %vm612, %v608, 0
      %v629 = vsel %vm612, %v609, 0
      %v632 = vsel %vm612, %v610, 0
      %v635 = vsel %vm612, %v611, 0
      %637 = vmatpush.msra.mxu0 0.0
      %638 = vmatpush.msra.mxu0 0.0
      %639 = vmatpush.msra.mxu0 0.0
      %640 = vmatpush.msra.mxu0 0.0
      %641 = vmatpush.msra.mxu0 0.0
      %642 = vmatpush.msra.mxu0 0.0
      %643 = vmatpush.msra.mxu0 0.0
      %644 = vmatpush.msra.mxu0 0.0
      %645 = vmatpush.msra.mxu0 0.0
      %646 = vmatpush.msra.mxu0 0.0
      %647 = vmatpush.msra.mxu0 0.0
      %648 = vmatpush.msra.mxu0 0.0
      %649 = vmatpush.msra.mxu0 %v595
      %650 = vmatpush.msra.mxu0 %v594
      %651 = vmatpush.msra.mxu0 %v593
      %652 = vmatpush.msra.mxu0 %v592
      %653 = vmatmul.f32.gmra.mxu0 %v614
      %v654 = vpop.f32.mrf.mxu0
      %v655 = vadd.f32 0.0, %v654
      %656 = vmatmul.f32.gmra.mxu0 %v617
      %v657 = vpop.f32.mrf.mxu0
      %v658 = vadd.f32 0.0, %v657
      %659 = vmatmul.f32.gmra.mxu0 %v620
      %v660 = vpop.f32.mrf.mxu0
      %v661 = vadd.f32 0.0, %v660
      %662 = vmatmul.f32.gmra.mxu0 %v623
      %v663 = vpop.f32.mrf.mxu0
      %v664 = vadd.f32 0.0, %v663
      %665 = vmatmul.f32.gmra.mxu0 %v626
      %v666 = vpop.f32.mrf.mxu0
      %v667 = vadd.f32 0.0, %v666
      %668 = vmatmul.f32.gmra.mxu0 %v629
      %v669 = vpop.f32.mrf.mxu0
      %v670 = vadd.f32 0.0, %v669
      %671 = vmatmul.f32.gmra.mxu0 %v632
      %v672 = vpop.f32.mrf.mxu0
      %v673 = vadd.f32 0.0, %v672
      %674 = vmatmul.f32.gmra.mxu0 %v635
      %v675 = vpop.f32.mrf.mxu0
      %v676 = vadd.f32 0.0, %v675
      %677 = vdwg.mxu0
      %v679 = vsel %vm612, %v596, 0
      %v682 = vsel %vm612, %v597, 0
      %v685 = vsel %vm612, %v598, 0
      %v688 = vsel %vm612, %v599, 0
      %v691 = vsel %vm612, %v600, 0
      %v694 = vsel %vm612, %v601, 0
      %v697 = vsel %vm612, %v602, 0
      %v700 = vsel %vm612, %v603, 0
      %702 = vmatpush.msra.mxu0 0.0
      %703 = vmatpush.msra.mxu0 0.0
      %704 = vmatpush.msra.mxu0 0.0
      %705 = vmatpush.msra.mxu0 0.0
      %706 = vmatpush.msra.mxu0 0.0
      %707 = vmatpush.msra.mxu0 0.0
      %708 = vmatpush.msra.mxu0 0.0
      %709 = vmatpush.msra.mxu0 0.0
      %710 = vmatpush.msra.mxu0 0.0
      %711 = vmatpush.msra.mxu0 0.0
      %712 = vmatpush.msra.mxu0 0.0
      %713 = vmatpush.msra.mxu0 0.0
      %714 = vmatpush.msra.mxu0 %v570
      %715 = vmatpush.msra.mxu0 %v567
      %716 = vmatpush.msra.mxu0 %v564
      %717 = vmatpush.msra.mxu0 %v561
      %718 = vmatmul.f32.gmra.mxu0 %v679
      %v719 = vpop.f32.mrf.mxu0
      %v720 = vadd.f32 %v655, %v719
      %721 = vmatmul.f32.gmra.mxu0 %v682
      %v722 = vpop.f32.mrf.mxu0
      %v723 = vadd.f32 %v658, %v722
      %724 = vmatmul.f32.gmra.mxu0 %v685
      %v725 = vpop.f32.mrf.mxu0
      %v726 = vadd.f32 %v661, %v725
      %727 = vmatmul.f32.gmra.mxu0 %v688
      %v728 = vpop.f32.mrf.mxu0
      %v729 = vadd.f32 %v664, %v728
      %730 = vmatmul.f32.gmra.mxu0 %v691
      %v731 = vpop.f32.mrf.mxu0
      %v732 = vadd.f32 %v667, %v731
      %733 = vmatmul.f32.gmra.mxu0 %v694
      %v734 = vpop.f32.mrf.mxu0
      %v735 = vadd.f32 %v670, %v734
      %736 = vmatmul.f32.gmra.mxu0 %v697
      %v737 = vpop.f32.mrf.mxu0
      %v738 = vadd.f32 %v673, %v737
      %739 = vmatmul.f32.gmra.mxu0 %v700
      %v740 = vpop.f32.mrf.mxu0
      %v741 = vadd.f32 %v676, %v740
      %742 = vdwg.mxu0
      %v743 = vld [vmem:[%s5] sm:$0xff]
      %v744 = vld [vmem:[%s5 + $0x8] sm:$0xff]
      %v745 = vld [vmem:[%s5 + $0x10] sm:$0xff]
      %v746 = vld [vmem:[%s5 + $0x18] sm:$0xff]
      %v747 = vld [vmem:[%s5 + $0x20] sm:$0xff]
      %v748 = vld [vmem:[%s5 + $0x28] sm:$0xff]
      %v749 = vld [vmem:[%s5 + $0x30] sm:$0xff]
      %v750 = vld [vmem:[%s5 + $0x38] sm:$0xff]
      %v752 = vsel %vm612, %v743, 0
      %v755 = vsel %vm612, %v744, 0
      %v758 = vsel %vm612, %v745, 0
      %v761 = vsel %vm612, %v746, 0
      %v764 = vsel %vm612, %v747, 0
      %v767 = vsel %vm612, %v748, 0
      %v770 = vsel %vm612, %v749, 0
      %v773 = vsel %vm612, %v750, 0
      %775 = vmatpush.msra.mxu0 0.0
      %776 = vmatpush.msra.mxu0 0.0
      %777 = vmatpush.msra.mxu0 0.0
      %778 = vmatpush.msra.mxu0 0.0
      %779 = vmatpush.msra.mxu0 0.0
      %780 = vmatpush.msra.mxu0 0.0
      %781 = vmatpush.msra.mxu0 0.0
      %782 = vmatpush.msra.mxu0 0.0
      %783 = vmatpush.msra.mxu0 0.0
      %784 = vmatpush.msra.mxu0 0.0
      %785 = vmatpush.msra.mxu0 0.0
      %786 = vmatpush.msra.mxu0 0.0
      %787 = vmatpush.msra.mxu0 %v428
      %788 = vmatpush.msra.mxu0 %v427
      %789 = vmatpush.msra.mxu0 %v426
      %790 = vmatpush.msra.mxu0 %v425
      %791 = vmatmul.f32.gmra.mxu0 %v752
      %v792 = vpop.f32.mrf.mxu0
      %v793 = vadd.f32 0.0, %v792
      %794 = vmatmul.f32.gmra.mxu0 %v755
      %v795 = vpop.f32.mrf.mxu0
      %v796 = vadd.f32 0.0, %v795
      %797 = vmatmul.f32.gmra.mxu0 %v758
      %v798 = vpop.f32.mrf.mxu0
      %v799 = vadd.f32 0.0, %v798
      %800 = vmatmul.f32.gmra.mxu0 %v761
      %v801 = vpop.f32.mrf.mxu0
      %v802 = vadd.f32 0.0, %v801
      %803 = vmatmul.f32.gmra.mxu0 %v764
      %v804 = vpop.f32.mrf.mxu0
      %v805 = vadd.f32 0.0, %v804
      %806 = vmatmul.f32.gmra.mxu0 %v767
      %v807 = vpop.f32.mrf.mxu0
      %v808 = vadd.f32 0.0, %v807
      %809 = vmatmul.f32.gmra.mxu0 %v770
      %v810 = vpop.f32.mrf.mxu0
      %v811 = vadd.f32 0.0, %v810
      %812 = vmatmul.f32.gmra.mxu0 %v773
      %v813 = vpop.f32.mrf.mxu0
      %v814 = vadd.f32 0.0, %v813
      %815 = vdwg.mxu0
      %v816 = vadd.f32 %v720, %v793
      %v817 = vadd.f32 %v723, %v796
      %v818 = vadd.f32 %v726, %v799
      %v819 = vadd.f32 %v729, %v802
      %v820 = vadd.f32 %v732, %v805
      %v821 = vadd.f32 %v735, %v808
      %v822 = vadd.f32 %v738, %v811
      %v823 = vadd.f32 %v741, %v814
      %v824 = vld [vmem:[%s6] sm:$0xff]
      %v825 = vld [vmem:[%s6 + $0x8] sm:$0xff]
      %v826 = vld [vmem:[%s6 + $0x10] sm:$0xff]
      %v827 = vld [vmem:[%s6 + $0x18] sm:$0xff]
      %v828 = vld [vmem:[%s6 + $0x20] sm:$0xff]
      %v829 = vld [vmem:[%s6 + $0x28] sm:$0xff]
      %v830 = vld [vmem:[%s6 + $0x30] sm:$0xff]
      %v831 = vld [vmem:[%s6 + $0x38] sm:$0xff]
      %833 = vset.pattern.permute.xlu0 0
      %834 = vperm.xlu0 %833, %v824
      %v835 = vpop.permute.xlu0 %834
      %838 = vset.pattern.permute.xlu0 0
      %839 = vperm.xlu0 %838, %v825
      %v840 = vpop.permute.xlu0 %839
      %843 = vset.pattern.permute.xlu0 0
      %844 = vperm.xlu0 %843, %v826
      %v845 = vpop.permute.xlu0 %844
      %848 = vset.pattern.permute.xlu0 0
      %849 = vperm.xlu0 %848, %v827
      %v850 = vpop.permute.xlu0 %849
      %853 = vset.pattern.permute.xlu0 0
      %854 = vperm.xlu0 %853, %v828
      %v855 = vpop.permute.xlu0 %854
      %858 = vset.pattern.permute.xlu0 0
      %859 = vperm.xlu0 %858, %v829
      %v860 = vpop.permute.xlu0 %859
      %863 = vset.pattern.permute.xlu0 0
      %864 = vperm.xlu0 %863, %v830
      %v865 = vpop.permute.xlu0 %864
      %868 = vset.pattern.permute.xlu0 0
      %869 = vperm.xlu0 %868, %v831
      %v870 = vpop.permute.xlu0 %869
      %v872 = vadd.f32 %v816, %v835
      %v873 = vadd.f32 %v817, %v840
      %v874 = vadd.f32 %v818, %v845
      %v875 = vadd.f32 %v819, %v850
      %v876 = vadd.f32 %v820, %v855
      %v877 = vadd.f32 %v821, %v860
      %v878 = vadd.f32 %v822, %v865
      %v879 = vadd.f32 %v823, %v870
      %v880 = vmax.f32 %v872, 0.0
      %v881 = vmax.f32 %v873, 0.0
      %v882 = vmax.f32 %v874, 0.0
      %v883 = vmax.f32 %v875, 0.0
      %v884 = vmax.f32 %v876, 0.0
      %v885 = vmax.f32 %v877, 0.0
      %v886 = vmax.f32 %v878, 0.0
      %v887 = vmax.f32 %v879, 0.0
      %v888 = vld [vmem:[%s7] sm:$0xff]
      %v889 = vld [vmem:[%s7 + $0x8] sm:$0xff]
      %v890 = vld [vmem:[%s7 + $0x10] sm:$0xff]
      %v891 = vld [vmem:[%s7 + $0x18] sm:$0xff]
      %v892 = vld [vmem:[%s8] sm:$0xff]
      %v893 = vld [vmem:[%s8 + $0x8] sm:$0xff]
      %v894 = vld [vmem:[%s8 + $0x10] sm:$0xff]
      %v895 = vld [vmem:[%s8 + $0x18] sm:$0xff]
      %897 = vset.pattern.permute.xlu0 0
      %898 = vperm.xlu0 %897, %v892
      %v899 = vpop.permute.xlu0 %898
      %902 = vset.pattern.permute.xlu0 0
      %903 = vperm.xlu0 %902, %v893
      %v904 = vpop.permute.xlu0 %903
      %907 = vset.pattern.permute.xlu0 0
      %908 = vperm.xlu0 %907, %v894
      %v909 = vpop.permute.xlu0 %908
      %912 = vset.pattern.permute.xlu0 0
      %913 = vperm.xlu0 %912, %v895
      %v914 = vpop.permute.xlu0 %913
      %vm916 = vcmask 523264
      %v918 = vsel %vm916, %v888, 0
      %v921 = vsel %vm916, %v889, 0
      %v924 = vsel %vm916, %v890, 0
      %v927 = vsel %vm916, %v891, 0
      %929 = vmatpush.msra.mxu0 0.0
      %930 = vmatpush.msra.mxu0 0.0
      %931 = vmatpush.msra.mxu0 0.0
      %932 = vmatpush.msra.mxu0 0.0
      %933 = vmatpush.msra.mxu0 0.0
      %934 = vmatpush.msra.mxu0 0.0
      %935 = vmatpush.msra.mxu0 0.0
      %936 = vmatpush.msra.mxu0 0.0
      %937 = vmatpush.msra.mxu0 %v887
      %938 = vmatpush.msra.mxu0 %v886
      %939 = vmatpush.msra.mxu0 %v885
      %940 = vmatpush.msra.mxu0 %v884
      %941 = vmatpush.msra.mxu0 %v883
      %942 = vmatpush.msra.mxu0 %v882
      %943 = vmatpush.msra.mxu0 %v881
      %944 = vmatpush.msra.mxu0 %v880
      %945 = vmatmul.f32.gmra.mxu0 %v918
      %v946 = vpop.f32.mrf.mxu0
      %v947 = vadd.f32 %v899, %v946
      %948 = vmatmul.f32.gmra.mxu0 %v921
      %v949 = vpop.f32.mrf.mxu0
      %v950 = vadd.f32 %v904, %v949
      %951 = vmatmul.f32.gmra.mxu0 %v924
      %v952 = vpop.f32.mrf.mxu0
      %v953 = vadd.f32 %v909, %v952
      %954 = vmatmul.f32.gmra.mxu0 %v927
      %v955 = vpop.f32.mrf.mxu0
      %v956 = vadd.f32 %v914, %v955
      %957 = vdwg.mxu0
      %v958 = vld [vmem:[#allocation2] sm:$0xff]
      %v959 = vld [vmem:[#allocation2 + $0x8] sm:$0xff]
      %v960 = vld [vmem:[#allocation2 + $0x10] sm:$0xff]
      %v961 = vld [vmem:[#allocation2 + $0x18] sm:$0xff]
      %962 = vmatpush.msra.mxu0 %v542
      %963 = vmatpush.msra.mxu0 %v541
      %964 = vmatpush.msra.mxu0 %v540
      %965 = vmatpush.msra.mxu0 %v539
      %966 = vmatpush.msra.mxu0 %v538
      %967 = vmatpush.msra.mxu0 %v537
      %968 = vmatpush.msra.mxu0 %v536
      %969 = vmatpush.msra.mxu0 %v535
      %970 = vmatpush.msra.mxu0 %v534
      %971 = vmatpush.msra.mxu0 %v533
      %972 = vmatpush.msra.mxu0 %v532
      %973 = vmatpush.msra.mxu0 %v531
      %974 = vmatpush.msra.mxu0 %v530
      %975 = vmatpush.msra.mxu0 %v529
      %976 = vmatpush.msra.mxu0 %v528
      %977 = vmatpush.msra.mxu0 %v527
      %978 = vmatmul.f32.gmra.mxu0 %v947
      %v979 = vpop.f32.mrf.mxu0
      %v980 = vadd.f32 0.0, %v979
      %981 = vmatmul.f32.gmra.mxu0 %v950
      %v982 = vpop.f32.mrf.mxu0
      %v983 = vadd.f32 0.0, %v982
      %984 = vmatmul.f32.gmra.mxu0 %v953
      %v985 = vpop.f32.mrf.mxu0
      %v986 = vadd.f32 0.0, %v985
      %987 = vmatmul.f32.gmra.mxu0 %v956
      %v988 = vpop.f32.mrf.mxu0
      %v989 = vadd.f32 0.0, %v988
      %990 = vdwg.mxu0
      %v991 = vadd.f32 %v958, %v980
      %v992 = vadd.f32 %v959, %v983
      %v993 = vadd.f32 %v960, %v986
      %v994 = vadd.f32 %v961, %v989
      %995 = vst [vmem:[#allocation2] sm:$0xff] %v991
      %996 = vst [vmem:[#allocation2 + $0x8] sm:$0xff] %v992
      %997 = vst [vmem:[#allocation2 + $0x10] sm:$0xff] %v993
      %998 = vst [vmem:[#allocation2 + $0x18] sm:$0xff] %v994
      %v999 = vld [vmem:[#allocation3] sm:$0x1]
      %v1000 = vadd.f32 %v527, %v528
      %v1001 = vadd.f32 %v1000, %v529
      %v1002 = vadd.f32 %v1001, %v530
      %v1003 = vadd.f32 %v1002, %v531
      %v1004 = vadd.f32 %v1003, %v532
      %v1005 = vadd.f32 %v1004, %v533
      %v1006 = vadd.f32 %v1005, %v534
      %v1007 = vadd.f32 %v1006, %v535
      %v1008 = vadd.f32 %v1007, %v536
      %v1009 = vadd.f32 %v1008, %v537
      %v1010 = vadd.f32 %v1009, %v538
      %v1011 = vadd.f32 %v1010, %v539
      %v1012 = vadd.f32 %v1011, %v540
      %v1013 = vadd.f32 %v1012, %v541
      %v1014 = vadd.f32 %v1013, %v542
      %v1015 = vrot.slane %v1014, 4
      %v1016 = vadd.f32 %v1014, %v1015
      %v1017 = vrot.slane %v1016, 2
      %v1018 = vadd.f32 %v1016, %v1017
      %v1019 = vrot.slane %v1018, 1
      %v1020 = vadd.f32 %v1018, %v1019
      %v1021 = vadd.f32 %v999, %v1020
      %1022 = vst [vmem:[#allocation3] sm:$0x1] %v1021
      // Predicated region
      $region61: #{line_layer_forward.2} parent=55 // pred_check
        %p1023 = pneg %p412
      $region62: #{line_layer_forward.2} parent=55 // pred_check_branch
        %1025 = sbr.rel (%p1023) target = $region64
      $region63: #{line_layer_forward.2} parent=55 // pred_region
        %v1026 = vld [vmem:[#allocation3] sm:$0x1]
        %vm1027 = vcmp.gt.f32.partialorder %v1026, 0.0
        %v1028 = vmax.f32 %v1026, 1.0
        %v1029 = vrcp.pop %v1028
        %v1030 = vmul.f32 %v1028, %v1029
        %v1031 = vsub.f32 1.0, %v1030
        %v1032 = vmul.f32 %v1029, %v1031
        %v1033 = vadd.f32 %v1029, %v1032
        %vm1034 = vweird.f32 %v1028
        %vm1035 = vweird.f32 %v1029
        %vm1036 = vmor %vm1034, %vm1035
        %v1037 = vsel %vm1036, %v1029, %v1033
        %v1038 = vand.u32 2147483647, %v1028
        %vm1039 = vcmp.eq.f32.partialorder %v1038, 8.507059e+37
        %v1040 = vand.u32 %v1028, 2147483648
        %v1041 = vor.u32 1.1754944e-38, %v1040
        %v1042 = vsel %vm1039, %v1041, %v1037
        %v1043 = vmul.f32 1.0, %v1042
        %v1044 = vsel %vm1027, %v1043, 0.0
        %v1045 = vld [vmem:[#allocation2] sm:$0xff]
        %v1046 = vld [vmem:[#allocation2 + $0x8] sm:$0xff]
        %v1047 = vld [vmem:[#allocation2 + $0x10] sm:$0xff]
        %v1048 = vld [vmem:[#allocation2 + $0x18] sm:$0xff]
        %v1050 = vperm.slane %v1044, 0
        %v1052 = vmul.f32 %v1045, %v1050
        %v1053 = vmul.f32 %v1046, %v1050
        %v1054 = vmul.f32 %v1047, %v1050
        %v1055 = vmul.f32 %v1048, %v1050
        %v1056 = vadd.f32 %v421, %v1052
        %v1057 = vadd.f32 %v422, %v1053
        %v1058 = vadd.f32 %v423, %v1054
        %v1059 = vadd.f32 %v424, %v1055
        %1060 = vst [vmem:[%s411] sm:$0xff] %v1056
        %1061 = vst [vmem:[%s411 + $0x8] sm:$0xff] %v1057
        %1062 = vst [vmem:[%s411 + $0x10] sm:$0xff] %v1058
        %1063 = vst [vmem:[%s411 + $0x18] sm:$0xff] %v1059
      $region64: #{line_layer_forward.2} parent=55 // pred_fallthru
        _
      %p1064 = scmp.lt.s32.totalorder %s24, 1
      %s1065 = scalar_select %p1064, %s24, 1
      %s1066 = smul.addr %s1065, 4
      %s1067 = smul.addr %s1066, 8
      %s1068 = scalar_lea.vmem %s9, %s1067
      // Predicated region
      $region65: #{line_layer_forward.2} parent=55 // pred_check
        %p1069 = pneg %p258
      $region66: #{line_layer_forward.2} parent=55 // pred_check_branch
        %1071 = sbr.rel (%p1069) target = $region68
      $region67: #{line_layer_forward.2} parent=55 // pred_region
        _
      $region68: #{line_layer_forward.2} parent=55 // pred_fallthru
        _
    $region56: #{line_layer_forward.2} parent=5 // pred_fallthru
      _
    %p1072 = scmp.le.s32.totalorder 2, %s15
    // Predicated region
    $region69: #{line_layer_forward.2} parent=5 // pred_check
      %p1073 = pneg %p1072
    $region70: #{line_layer_forward.2} parent=5 // pred_check_branch
      %1075 = sbr.rel (%p1073) target = $region72
    $region71: #{line_layer_forward.2} parent=5 // pred_region
      %s1076 = ssub.s32 %s15, 2
      // Predicated region
      $region73: #{line_layer_forward.2} parent=71 // pred_check
        %p1077 = pneg %p264
      $region74: #{line_layer_forward.2} parent=71 // pred_check_branch
        %1079 = sbr.rel (%p1077) target = $region76
      $region75: #{line_layer_forward.2} parent=71 // pred_region
        %p1080 = scmp.lt.s32.totalorder %s26, 1
        %s1081 = scalar_select %p1080, %s26, 1
        %s1082 = smul.addr %s1081, 4
        %s1083 = smul.addr %s1082, 8
        %s1084 = scalar_lea.vmem %s9, %s1083
      $region76: #{line_layer_forward.2} parent=71 // pred_fallthru
        _
    $region72: #{line_layer_forward.2} parent=5 // pred_fallthru
      _
  $region6: #{line_layer_forward.2} parent=0 // loop_footer
    %s19 = sadd.s32 1, %s15
  $region7: #{line_layer_forward.2} parent=0 // loop_footer_branch
    %14 = sbr.rel target = $region3
  $region8: #{line_layer_forward.2} parent=0 // loop_exit
    _

</llo_original>
